<compile_context>
chip_gen: v7x
topology: tpu7x:2x2x1
jax: 0.10.0
libtpu: 0.0.40
codegen_flags: <defaults>
</compile_context>

<pallas_src>
import functools
import numpy as np
import jax
import jax.numpy as jnp
from jax import lax
from jax.experimental import pallas as pl
from jax.experimental.pallas import tpu as pltpu


def _round_up(x, m):
    return ((x + m - 1) // m) * m


def _consistence_kernel(attn_ref, feat_ref, out_ref, *, c_th, p_th, true_d, k_max):
    attn = attn_ref[...]                                   # (Bb, 1, T)
    feat = feat_ref[...]                                   # (Bb, T, D)
    T = attn.shape[2]

    # lane iota without batch replication
    lane_t = lax.broadcasted_iota(jnp.int32, (1, 1, T), 2)

    # --- proposal generation: contiguous runs of attn > proposal threshold ---
    bin_ = (attn > p_th).astype(jnp.float32)               # (Bb, 1, T)
    prev = jnp.where(lane_t == 0, 0.0,
                     pltpu.roll(bin_, shift=1, axis=2))    # prev[t] = bin[t-1]
    starts = bin_ * (1.0 - prev)                           # run-start indicator
    n_seg = jnp.sum(starts, axis=2, keepdims=True)         # (Bb, 1, 1)

    # inclusive prefix-sum of `starts` over time: log2(T)-step roll/add scan
    # (XLU rotations + VPU adds; no (T,T) triangular matmul, no (T,T) constants)
    cum = starts
    d = 1
    while d < T:
        cum = cum + jnp.where(lane_t >= d, pltpu.roll(cum, shift=d, axis=2), 0.0)
        d *= 2

    # integer segment id per frame (id of its run, or -1 outside any run)
    seg_id = jnp.where(bin_ > 0.5, cum.astype(jnp.int32) - 1, -1)      # (Bb,1,T)
    # previous frame's segment id -- used to build the reference's
    # "inclusive of the exclusive run end" representative window
    seg_prev = jnp.where(lane_t == 0, -1,
                         pltpu.roll(seg_id, shift=1, axis=2))          # (Bb,1,T)

    # --- proposal membership, K capped at k_max (>= ceil(T_true/2)) ----------
    k_iota = lax.broadcasted_iota(jnp.int32, (1, k_max, T), 1)
    m_bool = seg_id == k_iota                              # (Bb, K, T)
    M = m_bool.astype(jnp.float32)

    len_k = jnp.sum(M, axis=2, keepdims=True)              # (Bb, K, 1)
    inv_len = 1.0 / jnp.maximum(len_k, 1.0)
    valid = (len_k > 0.0).astype(jnp.float32)

    # --- attention-level consistency: within-proposal variance ---------------
    # variance = E[x^2] - mean^2 (attn in [0,1) -> numerically benign)
    attn2 = attn * attn                                    # (Bb, 1, T)
    s1 = jnp.sum(jnp.where(m_bool, attn, 0.0), axis=2, keepdims=True)
    s2 = jnp.sum(jnp.where(m_bool, attn2, 0.0), axis=2, keepdims=True)
    mean_k = s1 * inv_len
    var_k = s2 * inv_len - mean_k * mean_k
    video_attn = jnp.sum(valid * var_k, axis=1, keepdims=True)    # (Bb, 1, 1)
    attn_sum = jnp.sum(video_attn / jnp.maximum(n_seg, 1.0))      # scalar

    # --- feature-level consistency -------------------------------------------
    # representative window for run k = run(k) U {first frame after run(k)}:
    # frame t is in-window iff seg_id[t] == k or seg_id[t-1] == k.
    rep_row = (attn > c_th).astype(jnp.float32)            # (Bb, 1, T)
    win_bool = jnp.logical_or(m_bool, seg_prev == k_iota)  # (Bb, K, T)
    R = jnp.where(win_bool, rep_row, 0.0)                  # (Bb, K, T)
    rep_cnt = jnp.sum(R, axis=2, keepdims=True)
    inv_rep = 1.0 / jnp.maximum(rep_cnt, 1.0)

    # single fused MXU matmul: diff = mean_prop(feat) - mean_rep(feat)
    W = M * inv_len - R * inv_rep                          # (Bb, K, T)
    diff = jnp.einsum('bkt,btd->bkd', W, feat,
                      preferred_element_type=jnp.float32)  # (Bb, K, D)
    mse_k = jnp.sum(diff * diff, axis=2, keepdims=True) * (1.0 / float(true_d))

    has_rep = ((rep_cnt > 0.0) & (len_k > 0.0)).astype(jnp.float32)
    feat_sum = jnp.sum(has_rep * mse_k)                    # scalar
    feat_cnt = jnp.sum(has_rep)                            # scalar

    # --- lane-dense per-block partials (independent per grid step) -----------
    lane_o = lax.broadcasted_iota(jnp.int32, out_ref.shape, 2)
    row = jnp.where(lane_o == 0, feat_sum, 0.0)
    row = jnp.where(lane_o == 1, feat_cnt, row)
    row = jnp.where(lane_o == 2, attn_sum, row)
    out_ref[...] = row


def consistence_loss(attn, feat, *, consistence_threshold, consistence_proposal_threshold,
                     feat_level_loss_weight, attn_level_loss_weight):
    """attn: (B, T, 1) float32, feat: (B, T, D) float32 -> scalar total loss."""
    B, T, _ = attn.shape
    D = feat.shape[-1]
    c_th = float(consistence_threshold)
    p_th = float(consistence_proposal_threshold)

    # Lane-dense padding: T, D -> multiples of 128. Padded attn entries are
    # below both thresholds, so they can never start a proposal nor be a
    # representative frame; padded feat columns are zero and cancel exactly.
    T_pad = _round_up(max(T, 128), 128)
    D_pad = _round_up(max(D, 128), 128)
    # A video of T frames has at most ceil(T/2) proposals -> cap the k axis.
    k_max = max(8, _round_up((T + 1) // 2, 8))
    fill = min(p_th, c_th) - 1.0

    # Pick the batch block so that (a) grid >= 2 whenever B >= 2 (both v7x
    # TensorCores get a shard of the "parallel" axis) and (b) the per-step
    # footprint fits a VMEM budget that is safe on every generation
    # (v7x: 64 MiB physical / 32 MiB default scoped, v5e: 16 MiB default).
    budget = 48 * 1024 * 1024

    def footprint(b):
        f = 2 * b * T_pad * D_pad * 4             # feat block (double-buffered)
        f += 2 * b * T_pad * 4                    # attn block (double-buffered)
        f += 6 * b * k_max * T_pad * 4            # live (b, K, T) temporaries
        f += 2 * b * k_max * D_pad * 4            # diff + squared diff
        f += 2 * 8 * 128 * 4                      # output block
        return f

    b_cap = min(8, max(1, (B + 1) // 2)) if B > 1 else 1
    b_blk = b_cap
    while b_blk > 1 and footprint(b_blk) > budget:
        b_blk -= 1
    # TODO(synk): if footprint(1) still exceeds the budget (very long T / huge D),
    # strip-tile the K axis in-kernel and add a D grid axis instead of shrinking b_blk.

    B_pad = _round_up(B, b_blk)
    grid_b = B_pad // b_blk

    attn_p = jnp.pad(attn.astype(jnp.float32).reshape(B, 1, T),
                     ((0, B_pad - B), (0, 0), (0, T_pad - T)),
                     constant_values=fill)
    feat_p = jnp.pad(feat.astype(jnp.float32),
                     ((0, B_pad - B), (0, T_pad - T), (0, D_pad - D)))

    kernel = functools.partial(_consistence_kernel, c_th=c_th, p_th=p_th,
                               true_d=D, k_max=k_max)

    vmem_limit = int(min(56 * 1024 * 1024,
                         max(32 * 1024 * 1024, footprint(b_blk) * 3 // 2)))

    partials = pl.pallas_call(
        kernel,
        out_shape=jax.ShapeDtypeStruct((grid_b, 8, 128), jnp.float32),
        grid=(grid_b,),
        in_specs=[
            pl.BlockSpec((b_blk, 1, T_pad), lambda g: (g, 0, 0)),
            pl.BlockSpec((b_blk, T_pad, D_pad), lambda g: (g, 0, 0)),
        ],
        out_specs=pl.BlockSpec((1, 8, 128), lambda g: (g, 0, 0)),
        compiler_params=pltpu.CompilerParams(
            dimension_semantics=("parallel",),
            vmem_limit_bytes=vmem_limit),
    )(attn_p, feat_p)

    feat_sum = jnp.sum(partials[:, 0, 0])
    feat_cnt = jnp.sum(partials[:, 0, 1])
    attn_sum = jnp.sum(partials[:, 0, 2])

    feat_loss = jnp.where(feat_cnt > 0.0, feat_sum / jnp.maximum(feat_cnt, 1.0), 0.0)
    attn_loss = attn_sum / B   # len(proposals) == B in the reference implementation
    return feat_level_loss_weight * feat_loss + attn_level_loss_weight * attn_loss


def _reference_loss(attn, feat, c_th, p_th, w_f, w_a):
    """numpy port of the torch module (host-side, for verification)."""
    attn = np.asarray(attn, np.float32).squeeze(-1)   # (B, T)
    feat = np.asarray(feat, np.float32)               # (B, T, D)
    B, T = attn.shape
    proposals = {}
    for i in range(B):
        preds = (attn[i] > p_th).astype(int)
        diff = np.append(preds, 0) - np.append(0, preds)
        starts = np.where(diff == 1)[0]
        ends = np.where(diff == -1)[0]
        if len(starts) == 0 or len(ends) == 0:
            proposals[i] = []
            continue
        plist = []
        for s, e in zip(starts, ends):
            if e < s:
                continue
            plist.append((int(s), int(e)))
        proposals[i] = plist
    rep = {i: np.where(attn[i] > c_th)[0] for i in range(B)}
    # feature level
    mses = []
    for i in range(B):
        for (s, e) in proposals[i]:
            cur = [feat[i, r] for r in rep[i] if s <= r <= e]
            if cur:
                pf = feat[i, s:e].mean(axis=0)
                rf = np.stack(cur).mean(axis=0)
                mses.append(np.mean((pf - rf) ** 2))
    feat_loss = float(np.sum(mses) / len(mses)) if mses else 0.0
    # attention level
    a_loss = 0.0
    for i in range(B):
        plist = proposals[i]
        if len(plist) == 0:
            continue
        vl = 0.0
        for (s, e) in plist:
            seg = attn[i, s:e]
            m = seg.mean()
            vl += float(np.mean((seg - m) ** 2))
        a_loss += vl / len(plist)
    a_loss = a_loss / len(proposals)
    return w_f * feat_loss + w_a * a_loss


if __name__ == "__main__":
    # deterministic hyper-parameters (module __init__ arguments)
    consistence_threshold = 0.7
    consistence_proposal_threshold = 0.4
    feat_level_loss_weight = 1.0
    attn_level_loss_weight = 1.0

    key = jax.random.PRNGKey(0)
    k1, k2 = jax.random.split(key)
    B, T, D = 2, 16, 32
    attn = jax.random.uniform(k1, (B, T, 1), dtype=jnp.float32)   # attention in [0, 1)
    feat = jax.random.normal(k2, (B, T, D), dtype=jnp.float32)

    total = consistence_loss(
        attn, feat,
        consistence_threshold=consistence_threshold,
        consistence_proposal_threshold=consistence_proposal_threshold,
        feat_level_loss_weight=feat_level_loss_weight,
        attn_level_loss_weight=attn_level_loss_weight,
    )
    total = jax.block_until_ready(total)

    ref = _reference_loss(np.asarray(attn), np.asarray(feat),
                          consistence_threshold, consistence_proposal_threshold,
                          feat_level_loss_weight, attn_level_loss_weight)
    np.testing.assert_allclose(np.asarray(total), np.float32(ref), rtol=2e-4, atol=1e-5)

    print("KERNEL_OK")
</pallas_src>

<mosaic_0001>
module attributes {stable_mosaic.version = 11 : i64} {
  func.func @_consistence_kernel(%arg0: i32, %arg1: memref<1x1x128xf32, #tpu.memory_space<vmem>>, %arg2: memref<1x128x128xf32, #tpu.memory_space<vmem>>, %arg3: memref<1x8x128xf32, #tpu.memory_space<vmem>>) attributes {dimension_semantics = [#tpu.dimension_semantics<parallel>], iteration_bounds = array<i64: 2>, scalar_prefetch = 0 : i64, scratch_operands = 0 : i64, tpu.core_type = #tpu.core_type<tc>, window_params = [{transform_indices = @transform_0, window_bounds = array<i64: 1, 1, 128>}, {transform_indices = @transform_1, window_bounds = array<i64: 1, 128, 128>}, {transform_indices = @transform_2, window_bounds = array<i64: 1, 8, 128>}]} {
    %c0 = arith.constant 0 : index
    %c0_0 = arith.constant 0 : index
    %c0_1 = arith.constant 0 : index
    %0 = vector.load %arg1[%c0, %c0_0, %c0_1] : memref<1x1x128xf32, #tpu.memory_space<vmem>>, vector<1x1x128xf32>
    %c0_2 = arith.constant 0 : index
    %c0_3 = arith.constant 0 : index
    %c0_4 = arith.constant 0 : index
    %1 = vector.load %arg2[%c0_2, %c0_3, %c0_4] : memref<1x128x128xf32, #tpu.memory_space<vmem>>, vector<1x128x128xf32>
    %2 = tpu.iota {dimensions = array<i32: 2>} : vector<1x1x128xi32>
    %cst = arith.constant 4.000000e-01 : f32
    %3 = vector.broadcast %cst : f32 to vector<1x1x128xf32>
    %4 = arith.cmpf ogt, %0, %3 : vector<1x1x128xf32>
    %5 = arith.extui %4 : vector<1x1x128xi1> to vector<1x1x128xi32>
    %6 = arith.sitofp %5 : vector<1x1x128xi32> to vector<1x1x128xf32>
    %c0_i32 = arith.constant 0 : i32
    %7 = vector.broadcast %c0_i32 : i32 to vector<1x1x128xi32>
    %8 = arith.cmpi eq, %2, %7 : vector<1x1x128xi32>
    %c1_i32 = arith.constant 1 : i32
    %9 = tpu.dynamic_rotate %6 by %c1_i32 dim 2 : vector<1x1x128xf32>, i32 -> vector<1x1x128xf32>
    %cst_5 = arith.constant 0.000000e+00 : f32
    %10 = vector.broadcast %cst_5 : f32 to vector<1x1x128xf32>
    %11 = arith.select %8, %10, %9 : vector<1x1x128xi1>, vector<1x1x128xf32>
    %cst_6 = arith.constant 1.000000e+00 : f32
    %12 = vector.broadcast %cst_6 : f32 to vector<1x1x128xf32>
    %13 = arith.subf %12, %11 : vector<1x1x128xf32>
    %14 = arith.mulf %6, %13 : vector<1x1x128xf32>
    %cst_7 = arith.constant dense<0.000000e+00> : vector<1x1xf32>
    %15 = vector.multi_reduction <add>, %14, %cst_7 [2] : vector<1x1x128xf32> to vector<1x1xf32>
    %16 = vector.shape_cast %15 : vector<1x1xf32> to vector<1x1x1xf32>
    %c1_i32_8 = arith.constant 1 : i32
    %17 = vector.broadcast %c1_i32_8 : i32 to vector<1x1x128xi32>
    %18 = arith.cmpi sge, %2, %17 : vector<1x1x128xi32>
    %c1_i32_9 = arith.constant 1 : i32
    %19 = tpu.dynamic_rotate %14 by %c1_i32_9 dim 2 : vector<1x1x128xf32>, i32 -> vector<1x1x128xf32>
    %cst_10 = arith.constant 0.000000e+00 : f32
    %20 = vector.broadcast %cst_10 : f32 to vector<1x1x128xf32>
    %21 = arith.select %18, %19, %20 : vector<1x1x128xi1>, vector<1x1x128xf32>
    %22 = arith.addf %14, %21 : vector<1x1x128xf32>
    %c2_i32 = arith.constant 2 : i32
    %23 = vector.broadcast %c2_i32 : i32 to vector<1x1x128xi32>
    %24 = arith.cmpi sge, %2, %23 : vector<1x1x128xi32>
    %c2_i32_11 = arith.constant 2 : i32
    %25 = tpu.dynamic_rotate %22 by %c2_i32_11 dim 2 : vector<1x1x128xf32>, i32 -> vector<1x1x128xf32>
    %cst_12 = arith.constant 0.000000e+00 : f32
    %26 = vector.broadcast %cst_12 : f32 to vector<1x1x128xf32>
    %27 = arith.select %24, %25, %26 : vector<1x1x128xi1>, vector<1x1x128xf32>
    %28 = arith.addf %22, %27 : vector<1x1x128xf32>
    %c4_i32 = arith.constant 4 : i32
    %29 = vector.broadcast %c4_i32 : i32 to vector<1x1x128xi32>
    %30 = arith.cmpi sge, %2, %29 : vector<1x1x128xi32>
    %c4_i32_13 = arith.constant 4 : i32
    %31 = tpu.dynamic_rotate %28 by %c4_i32_13 dim 2 : vector<1x1x128xf32>, i32 -> vector<1x1x128xf32>
    %cst_14 = arith.constant 0.000000e+00 : f32
    %32 = vector.broadcast %cst_14 : f32 to vector<1x1x128xf32>
    %33 = arith.select %30, %31, %32 : vector<1x1x128xi1>, vector<1x1x128xf32>
    %34 = arith.addf %28, %33 : vector<1x1x128xf32>
    %c8_i32 = arith.constant 8 : i32
    %35 = vector.broadcast %c8_i32 : i32 to vector<1x1x128xi32>
    %36 = arith.cmpi sge, %2, %35 : vector<1x1x128xi32>
    %c8_i32_15 = arith.constant 8 : i32
    %37 = tpu.dynamic_rotate %34 by %c8_i32_15 dim 2 : vector<1x1x128xf32>, i32 -> vector<1x1x128xf32>
    %cst_16 = arith.constant 0.000000e+00 : f32
    %38 = vector.broadcast %cst_16 : f32 to vector<1x1x128xf32>
    %39 = arith.select %36, %37, %38 : vector<1x1x128xi1>, vector<1x1x128xf32>
    %40 = arith.addf %34, %39 : vector<1x1x128xf32>
    %c16_i32 = arith.constant 16 : i32
    %41 = vector.broadcast %c16_i32 : i32 to vector<1x1x128xi32>
    %42 = arith.cmpi sge, %2, %41 : vector<1x1x128xi32>
    %c16_i32_17 = arith.constant 16 : i32
    %43 = tpu.dynamic_rotate %40 by %c16_i32_17 dim 2 : vector<1x1x128xf32>, i32 -> vector<1x1x128xf32>
    %cst_18 = arith.constant 0.000000e+00 : f32
    %44 = vector.broadcast %cst_18 : f32 to vector<1x1x128xf32>
    %45 = arith.select %42, %43, %44 : vector<1x1x128xi1>, vector<1x1x128xf32>
    %46 = arith.addf %40, %45 : vector<1x1x128xf32>
    %c32_i32 = arith.constant 32 : i32
    %47 = vector.broadcast %c32_i32 : i32 to vector<1x1x128xi32>
    %48 = arith.cmpi sge, %2, %47 : vector<1x1x128xi32>
    %c32_i32_19 = arith.constant 32 : i32
    %49 = tpu.dynamic_rotate %46 by %c32_i32_19 dim 2 : vector<1x1x128xf32>, i32 -> vector<1x1x128xf32>
    %cst_20 = arith.constant 0.000000e+00 : f32
    %50 = vector.broadcast %cst_20 : f32 to vector<1x1x128xf32>
    %51 = arith.select %48, %49, %50 : vector<1x1x128xi1>, vector<1x1x128xf32>
    %52 = arith.addf %46, %51 : vector<1x1x128xf32>
    %c64_i32 = arith.constant 64 : i32
    %53 = vector.broadcast %c64_i32 : i32 to vector<1x1x128xi32>
    %54 = arith.cmpi sge, %2, %53 : vector<1x1x128xi32>
    %c64_i32_21 = arith.constant 64 : i32
    %55 = tpu.dynamic_rotate %52 by %c64_i32_21 dim 2 : vector<1x1x128xf32>, i32 -> vector<1x1x128xf32>
    %cst_22 = arith.constant 0.000000e+00 : f32
    %56 = vector.broadcast %cst_22 : f32 to vector<1x1x128xf32>
    %57 = arith.select %54, %55, %56 : vector<1x1x128xi1>, vector<1x1x128xf32>
    %58 = arith.addf %52, %57 : vector<1x1x128xf32>
    %cst_23 = arith.constant 5.000000e-01 : f32
    %59 = vector.broadcast %cst_23 : f32 to vector<1x1x128xf32>
    %60 = arith.cmpf ogt, %6, %59 : vector<1x1x128xf32>
    %61 = arith.fptosi %58 : vector<1x1x128xf32> to vector<1x1x128xi32>
    %c1_i32_24 = arith.constant 1 : i32
    %62 = vector.broadcast %c1_i32_24 : i32 to vector<1x1x128xi32>
    %63 = arith.subi %61, %62 : vector<1x1x128xi32>
    %c-1_i32 = arith.constant -1 : i32
    %64 = vector.broadcast %c-1_i32 : i32 to vector<1x1x128xi32>
    %65 = arith.select %60, %63, %64 : vector<1x1x128xi1>, vector<1x1x128xi32>
    %c0_i32_25 = arith.constant 0 : i32
    %66 = vector.broadcast %c0_i32_25 : i32 to vector<1x1x128xi32>
    %67 = arith.cmpi eq, %2, %66 : vector<1x1x128xi32>
    %c1_i32_26 = arith.constant 1 : i32
    %68 = tpu.dynamic_rotate %65 by %c1_i32_26 dim 2 : vector<1x1x128xi32>, i32 -> vector<1x1x128xi32>
    %c-1_i32_27 = arith.constant -1 : i32
    %69 = vector.broadcast %c-1_i32_27 : i32 to vector<1x1x128xi32>
    %70 = arith.select %67, %69, %68 : vector<1x1x128xi1>, vector<1x1x128xi32>
    %71 = tpu.iota {dimensions = array<i32: 1>} : vector<1x8x128xi32>
    %72 = vector.broadcast %65 : vector<1x1x128xi32> to vector<1x8x128xi32>
    %73 = arith.cmpi eq, %72, %71 : vector<1x8x128xi32>
    %74 = arith.extui %73 : vector<1x8x128xi1> to vector<1x8x128xi32>
    %75 = arith.sitofp %74 : vector<1x8x128xi32> to vector<1x8x128xf32>
    %cst_28 = arith.constant dense<0.000000e+00> : vector<1x8xf32>
    %76 = vector.multi_reduction <add>, %75, %cst_28 [2] : vector<1x8x128xf32> to vector<1x8xf32>
    %77 = vector.shape_cast %76 : vector<1x8xf32> to vector<1x8x1xf32>
    %cst_29 = arith.constant 1.000000e+00 : f32
    %78 = vector.broadcast %cst_29 : f32 to vector<1x8x1xf32>
    %79 = arith.maximumf %77, %78 : vector<1x8x1xf32>
    %cst_30 = arith.constant 1.000000e+00 : f32
    %80 = vector.broadcast %cst_30 : f32 to vector<1x8x1xf32>
    %81 = arith.divf %80, %79 : vector<1x8x1xf32>
    %cst_31 = arith.constant 0.000000e+00 : f32
    %82 = vector.broadcast %cst_31 : f32 to vector<1x8x1xf32>
    %83 = arith.cmpf ogt, %77, %82 : vector<1x8x1xf32>
    %84 = arith.extui %83 : vector<1x8x1xi1> to vector<1x8x1xi32>
    %85 = arith.sitofp %84 : vector<1x8x1xi32> to vector<1x8x1xf32>
    %86 = arith.mulf %0, %0 : vector<1x1x128xf32>
    %cst_32 = arith.constant 0.000000e+00 : f32
    %87 = vector.shape_cast %0 : vector<1x1x128xf32> to vector<1x1x128xf32>
    %88 = vector.broadcast %87 : vector<1x1x128xf32> to vector<1x8x128xf32>
    %89 = vector.broadcast %cst_32 : f32 to vector<1x8x128xf32>
    %90 = arith.select %73, %88, %89 : vector<1x8x128xi1>, vector<1x8x128xf32>
    %cst_33 = arith.constant dense<0.000000e+00> : vector<1x8xf32>
    %91 = vector.multi_reduction <add>, %90, %cst_33 [2] : vector<1x8x128xf32> to vector<1x8xf32>
    %92 = vector.shape_cast %91 : vector<1x8xf32> to vector<1x8x1xf32>
    %cst_34 = arith.constant 0.000000e+00 : f32
    %93 = vector.shape_cast %86 : vector<1x1x128xf32> to vector<1x1x128xf32>
    %94 = vector.broadcast %93 : vector<1x1x128xf32> to vector<1x8x128xf32>
    %95 = vector.broadcast %cst_34 : f32 to vector<1x8x128xf32>
    %96 = arith.select %73, %94, %95 : vector<1x8x128xi1>, vector<1x8x128xf32>
    %cst_35 = arith.constant dense<0.000000e+00> : vector<1x8xf32>
    %97 = vector.multi_reduction <add>, %96, %cst_35 [2] : vector<1x8x128xf32> to vector<1x8xf32>
    %98 = vector.shape_cast %97 : vector<1x8xf32> to vector<1x8x1xf32>
    %99 = arith.mulf %92, %81 : vector<1x8x1xf32>
    %100 = arith.mulf %98, %81 : vector<1x8x1xf32>
    %101 = arith.mulf %99, %99 : vector<1x8x1xf32>
    %102 = arith.subf %100, %101 : vector<1x8x1xf32>
    %103 = arith.mulf %85, %102 : vector<1x8x1xf32>
    %cst_36 = arith.constant dense<0.000000e+00> : vector<1x1xf32>
    %104 = vector.multi_reduction <add>, %103, %cst_36 [1] : vector<1x8x1xf32> to vector<1x1xf32>
    %105 = vector.shape_cast %104 : vector<1x1xf32> to vector<1x1x1xf32>
    %cst_37 = arith.constant 1.000000e+00 : f32
    %106 = vector.broadcast %cst_37 : f32 to vector<1x1x1xf32>
    %107 = arith.maximumf %16, %106 : vector<1x1x1xf32>
    %108 = arith.divf %105, %107 : vector<1x1x1xf32>
    %109 = vector.shape_cast %108 : vector<1x1x1xf32> to vector<1x1x1x1xf32>
    %cst_38 = arith.constant dense<0.000000e+00> : vector<1xf32>
    %110 = vector.multi_reduction <add>, %109, %cst_38 [1, 2, 3] : vector<1x1x1x1xf32> to vector<1xf32>
    %111 = vector.shape_cast %110 : vector<1xf32> to vector<1x1x1x1xf32>
    %112 = vector.extract %111[0, 0, 0, 0] : f32 from vector<1x1x1x1xf32>
    %cst_39 = arith.constant 0.699999988 : f32
    %113 = vector.broadcast %cst_39 : f32 to vector<1x1x128xf32>
    %114 = arith.cmpf ogt, %0, %113 : vector<1x1x128xf32>
    %115 = arith.extui %114 : vector<1x1x128xi1> to vector<1x1x128xi32>
    %116 = arith.sitofp %115 : vector<1x1x128xi32> to vector<1x1x128xf32>
    %117 = vector.broadcast %70 : vector<1x1x128xi32> to vector<1x8x128xi32>
    %118 = arith.cmpi eq, %117, %71 : vector<1x8x128xi32>
    %119 = arith.ori %73, %118 : vector<1x8x128xi1>
    %cst_40 = arith.constant 0.000000e+00 : f32
    %120 = vector.shape_cast %116 : vector<1x1x128xf32> to vector<1x1x128xf32>
    %121 = vector.broadcast %120 : vector<1x1x128xf32> to vector<1x8x128xf32>
    %122 = vector.broadcast %cst_40 : f32 to vector<1x8x128xf32>
    %123 = arith.select %119, %121, %122 : vector<1x8x128xi1>, vector<1x8x128xf32>
    %cst_41 = arith.constant dense<0.000000e+00> : vector<1x8xf32>
    %124 = vector.multi_reduction <add>, %123, %cst_41 [2] : vector<1x8x128xf32> to vector<1x8xf32>
    %125 = vector.shape_cast %124 : vector<1x8xf32> to vector<1x8x1xf32>
    %cst_42 = arith.constant 1.000000e+00 : f32
    %126 = vector.broadcast %cst_42 : f32 to vector<1x8x1xf32>
    %127 = arith.maximumf %125, %126 : vector<1x8x1xf32>
    %cst_43 = arith.constant 1.000000e+00 : f32
    %128 = vector.broadcast %cst_43 : f32 to vector<1x8x1xf32>
    %129 = arith.divf %128, %127 : vector<1x8x1xf32>
    %130 = vector.broadcast %81 : vector<1x8x1xf32> to vector<1x8x128xf32>
    %131 = arith.mulf %75, %130 : vector<1x8x128xf32>
    %132 = vector.broadcast %129 : vector<1x8x1xf32> to vector<1x8x128xf32>
    %133 = arith.mulf %123, %132 : vector<1x8x128xf32>
    %134 = arith.subf %131, %133 : vector<1x8x128xf32>
    "tpu.trace_start"() <{level = 10 : i32, message = "bkt,btd->bkd"}> : () -> ()
    %cst_44 = arith.constant dense<0.000000e+00> : vector<1x8x128xf32>
    %135 = tpu.matmul %134, %1, %cst_44 {dimension_numbers = #tpu.dot_dimension_numbers<[2], [1], [1], [2], [0, 0, 0, 1, 1, 2], [0], [0]>} : vector<1x8x128xf32>, vector<1x128x128xf32>, vector<1x8x128xf32> -> vector<1x8x128xf32>
    "tpu.trace_stop"() : () -> ()
    %136 = arith.mulf %135, %135 : vector<1x8x128xf32>
    %cst_45 = arith.constant dense<0.000000e+00> : vector<1x8xf32>
    %137 = vector.multi_reduction <add>, %136, %cst_45 [2] : vector<1x8x128xf32> to vector<1x8xf32>
    %138 = vector.shape_cast %137 : vector<1x8xf32> to vector<1x8x1xf32>
    %cst_46 = arith.constant 3.125000e-02 : f32
    %139 = vector.broadcast %cst_46 : f32 to vector<1x8x1xf32>
    %140 = arith.mulf %138, %139 : vector<1x8x1xf32>
    %cst_47 = arith.constant 0.000000e+00 : f32
    %141 = vector.broadcast %cst_47 : f32 to vector<1x8x1xf32>
    %142 = arith.cmpf ogt, %125, %141 : vector<1x8x1xf32>
    %cst_48 = arith.constant 0.000000e+00 : f32
    %143 = vector.broadcast %cst_48 : f32 to vector<1x8x1xf32>
    %144 = arith.cmpf ogt, %77, %143 : vector<1x8x1xf32>
    %145 = arith.andi %142, %144 : vector<1x8x1xi1>
    %146 = arith.extui %145 : vector<1x8x1xi1> to vector<1x8x1xi32>
    %147 = arith.sitofp %146 : vector<1x8x1xi32> to vector<1x8x1xf32>
    %148 = arith.mulf %147, %140 : vector<1x8x1xf32>
    %149 = vector.shape_cast %148 : vector<1x8x1xf32> to vector<1x1x8x1xf32>
    %cst_49 = arith.constant dense<0.000000e+00> : vector<1xf32>
    %150 = vector.multi_reduction <add>, %149, %cst_49 [1, 2, 3] : vector<1x1x8x1xf32> to vector<1xf32>
    %151 = vector.shape_cast %150 : vector<1xf32> to vector<1x1x1x1xf32>
    %152 = vector.extract %151[0, 0, 0, 0] : f32 from vector<1x1x1x1xf32>
    %153 = vector.shape_cast %147 : vector<1x8x1xf32> to vector<1x1x8x1xf32>
    %cst_50 = arith.constant dense<0.000000e+00> : vector<1xf32>
    %154 = vector.multi_reduction <add>, %153, %cst_50 [1, 2, 3] : vector<1x1x8x1xf32> to vector<1xf32>
    %155 = vector.shape_cast %154 : vector<1xf32> to vector<1x1x1x1xf32>
    %156 = vector.extract %155[0, 0, 0, 0] : f32 from vector<1x1x1x1xf32>
    %157 = tpu.iota {dimensions = array<i32: 2>} : vector<1x8x128xi32>
    %c0_i32_51 = arith.constant 0 : i32
    %158 = vector.broadcast %c0_i32_51 : i32 to vector<1x8x128xi32>
    %159 = arith.cmpi eq, %157, %158 : vector<1x8x128xi32>
    %cst_52 = arith.constant 0.000000e+00 : f32
    %160 = vector.broadcast %152 : f32 to vector<1x8x128xf32>
    %161 = vector.broadcast %cst_52 : f32 to vector<1x8x128xf32>
    %162 = arith.select %159, %160, %161 : vector<1x8x128xi1>, vector<1x8x128xf32>
    %c1_i32_53 = arith.constant 1 : i32
    %163 = vector.broadcast %c1_i32_53 : i32 to vector<1x8x128xi32>
    %164 = arith.cmpi eq, %157, %163 : vector<1x8x128xi32>
    %165 = vector.broadcast %156 : f32 to vector<1x8x128xf32>
    %166 = arith.select %164, %165, %162 : vector<1x8x128xi1>, vector<1x8x128xf32>
    %c2_i32_54 = arith.constant 2 : i32
    %167 = vector.broadcast %c2_i32_54 : i32 to vector<1x8x128xi32>
    %168 = arith.cmpi eq, %157, %167 : vector<1x8x128xi32>
    %169 = vector.broadcast %112 : f32 to vector<1x8x128xf32>
    %170 = arith.select %168, %169, %166 : vector<1x8x128xi1>, vector<1x8x128xf32>
    %c0_55 = arith.constant 0 : index
    %c0_56 = arith.constant 0 : index
    %c0_57 = arith.constant 0 : index
    %171 = vector.load %arg3[%c0_55, %c0_56, %c0_57] : memref<1x8x128xf32, #tpu.memory_space<vmem>>, vector<1x8x128xf32>
    tpu.vector_store %arg3[%c0_55, %c0_56, %c0_57], %170 {strides = array<i32>} : memref<1x8x128xf32, #tpu.memory_space<vmem>>, vector<1x8x128xf32>,
    return
  }
  func.func @transform_0(%arg0: i32) -> (i32, i32, i32) {
    %c0_i32 = arith.constant 0 : i32
    %c0_i32_0 = arith.constant 0 : i32
    %c0_i32_1 = arith.constant 0 : i32
    return %arg0, %c0_i32, %c0_i32_0 : i32, i32, i32
  }
  func.func @transform_1(%arg0: i32) -> (i32, i32, i32) {
    %c0_i32 = arith.constant 0 : i32
    %c0_i32_0 = arith.constant 0 : i32
    %c0_i32_1 = arith.constant 0 : i32
    return %arg0, %c0_i32, %c0_i32_0 : i32, i32, i32
  }
  func.func @transform_2(%arg0: i32) -> (i32, i32, i32) {
    %c0_i32 = arith.constant 0 : i32
    %c0_i32_0 = arith.constant 0 : i32
    %c0_i32_1 = arith.constant 0 : i32
    return %arg0, %c0_i32, %c0_i32_0 : i32, i32, i32
  }
}

</mosaic_0001>

<llo_original>
// kernel: tpu_custom_call.1
$region0: #{tpu_custom_call.1}
  #allocation0 [shape = 'u32[]', space=smem, size = 0x4, offset = 0x4, fixed_abs, tag = 'smem constant byte address 0x4 - core index']
  #allocation1 [shape = 'u32[144,128]{1,0:T(1,128)}', space=vmem, size = 0x12000, scoped, tag = 'internal scratch']
  %s0 = inlined_call_operand.hbm [shape: f32[2,1,128], index: 0, kind: input, shape index: {}]
  %s1 = inlined_call_operand.hbm [shape: f32[2,128,128], index: 1, kind: input, shape index: {}]
  %s2 = inlined_call_operand.hbm [shape: f32[2,8,128], index: 2, kind: output, shape index: {}]
  %s3 = sld [smem:[#allocation0]]
  $region49: #{tpu_custom_call.1} parent=0
    _
  %s5 = ssub.s32 1, %s3
  %s6 = scalar_select 0, %s5, %s3
  $region1: #{tpu_custom_call.1} parent=0
    #allocation2 [shape = 'u8[1024]{0}', space=vmem, size = 0x400, scoped, tag = 'input window, operand 0']
    #allocation3 [shape = 's32[2]{0}', space=sflag, size = 0x8, scoped, tag = 'scoped memory for tpu_custom_call.1']
    #allocation4 [shape = 's32[2]{0}', space=sflag, size = 0x8, scoped, tag = 'scoped memory for tpu_custom_call.1']
    #allocation5 [shape = 'u8[131072]{0}', space=vmem, size = 0x20000, scoped, tag = 'input window, operand 1']
    #allocation6 [shape = 's32[2]{0}', space=sflag, size = 0x8, scoped, tag = 'scoped memory for tpu_custom_call.1']
    #allocation7 [shape = 'u8[8192]{0}', space=vmem, size = 0x2000, scoped, tag = 'output window, operand 0']
    %7 = vsyncpa [#allocation3], 0
    %s8 = scalar_lea.sflag [#allocation3], 1
    %9 = vsyncpa %s8, 0
    %10 = vsyncpa [#allocation6], 0
    %s11 = scalar_lea.sflag [#allocation6], 1
    %12 = vsyncpa %s11, 0
    %13 = vsyncpa [#allocation4], 0
    %s14 = scalar_lea.sflag [#allocation4], 1
    %15 = vsyncpa %s14, 0
    loop: start=0, step=1, limit=4
    $region2: #{tpu_custom_call.1} parent=1 // loop_pre_header
      _
    $region3: #{tpu_custom_call.1} parent=1 // loop_header
      %s17 = sphi 0, %s21
      %p18 = scmp.ge.s32.totalorder %s17, 4
      %s27 = sphi 0, %s29
      %s30 = sphi 0, %s27
      %s31 = sphi 0, %s30
      %s47 = sphi 0, %s31
      %s53 = sphi 0, %s55
      %s56 = sphi 0, %s53
      %s57 = sphi 0, %s56
      %s73 = sphi 0, %s57
      %s79 = sphi 0, %s81
      %s82 = sphi 0, %s79
      %s83 = sphi 0, %s82
      %s99 = sphi 0, %s83
    $region4: #{tpu_custom_call.1} parent=1 // loop_header_branch
      %20 = sbr.rel (%p18) target = $region8
    $region5: #{tpu_custom_call.1} parent=1 // loop_body
      %s22 = ssub.s32 %s17, 1
      %s23 = ssub.s32 %s17, 2
      %s24 = sadd.s32 %s17, 1
      %s25 = ssub.s32 %s17, %s24
      %p26 = scmp.eq.s32.totalorder %s25, 0
      %s28 = sadd.s32 %s27, 1
      %s29 = scalar_select %p26, %s27, %s28
      %p32 = pneg %p26
      %p33 = scmp.eq.s32.totalorder %s17, 1
      %p34 = por %p32, %p33
      %p35 = scmp.ne.s32.totalorder %s27, %s30
      %p36 = scmp.eq.s32.totalorder %s17, 0
      %p37 = por %p35, %p36
      %p38 = scmp.ne.s32.totalorder %s27, %s30
      %p39 = scmp.eq.s32.totalorder %s22, 1
      %p40 = por %p38, %p39
      %p41 = scmp.ne.s32.totalorder %s30, %s31
      %p42 = scmp.eq.s32.totalorder %s22, 0
      %p43 = por %p41, %p42
      %p44 = scmp.ne.s32.totalorder %s30, %s31
      %p45 = scmp.eq.s32.totalorder %s23, 1
      %p46 = por %p44, %p45
      %p48 = scmp.ne.s32.totalorder %s31, %s47
      %p49 = scmp.eq.s32.totalorder %s23, 0
      %p50 = por %p48, %p49
      %s51 = ssub.s32 %s17, %s24
      %p52 = scmp.eq.s32.totalorder %s51, 0
      %s54 = sadd.s32 %s53, 1
      %s55 = scalar_select %p52, %s53, %s54
      %p58 = pneg %p52
      %p59 = scmp.eq.s32.totalorder %s17, 1
      %p60 = por %p58, %p59
      %p61 = scmp.ne.s32.totalorder %s53, %s56
      %p62 = scmp.eq.s32.totalorder %s17, 0
      %p63 = por %p61, %p62
      %p64 = scmp.ne.s32.totalorder %s53, %s56
      %p65 = scmp.eq.s32.totalorder %s22, 1
      %p66 = por %p64, %p65
      %p67 = scmp.ne.s32.totalorder %s56, %s57
      %p68 = scmp.eq.s32.totalorder %s22, 0
      %p69 = por %p67, %p68
      %p70 = scmp.ne.s32.totalorder %s56, %s57
      %p71 = scmp.eq.s32.totalorder %s23, 1
      %p72 = por %p70, %p71
      %p74 = scmp.ne.s32.totalorder %s57, %s73
      %p75 = scmp.eq.s32.totalorder %s23, 0
      %p76 = por %p74, %p75
      %s77 = ssub.s32 %s17, %s24
      %p78 = scmp.eq.s32.totalorder %s77, 0
      %s80 = sadd.s32 %s79, 1
      %s81 = scalar_select %p78, %s79, %s80
      %p84 = pneg %p78
      %p85 = scmp.eq.s32.totalorder %s17, 1
      %p86 = por %p84, %p85
      %p87 = scmp.ne.s32.totalorder %s79, %s82
      %p88 = scmp.eq.s32.totalorder %s17, 0
      %p89 = por %p87, %p88
      %p90 = scmp.ne.s32.totalorder %s79, %s82
      %p91 = scmp.eq.s32.totalorder %s22, 1
      %p92 = por %p90, %p91
      %p93 = scmp.ne.s32.totalorder %s82, %s83
      %p94 = scmp.eq.s32.totalorder %s22, 0
      %p95 = por %p93, %p94
      %p96 = scmp.ne.s32.totalorder %s82, %s83
      %p97 = scmp.eq.s32.totalorder %s23, 1
      %p98 = por %p96, %p97
      %p100 = scmp.ne.s32.totalorder %s83, %s99
      %p101 = scmp.eq.s32.totalorder %s23, 0
      %p102 = por %p100, %p101
      %p103 = scmp.le.s32.totalorder 1, %s17
      %p104 = scmp.lt.s32.totalorder %s17, 3
      %p105 = pnand %p103, %p104
      %p106 = pneg %p105
      // Predicated region
      $region9: #{tpu_custom_call.1} parent=5 // pred_check
        _
      $region10: #{tpu_custom_call.1} parent=5 // pred_check_branch
        %108 = sbr.rel (%p105) target = $region12
      $region11: #{tpu_custom_call.1} parent=5 // pred_region
        %s109 = ssub.s32 %s17, 1
      $region12: #{tpu_custom_call.1} parent=5 // pred_fallthru
        _
      %p110 = scmp.lt.s32.totalorder %s17, 2
      // Predicated region
      $region13: #{tpu_custom_call.1} parent=5 // pred_check
        %p111 = pneg %p110
      $region14: #{tpu_custom_call.1} parent=5 // pred_check_branch
        %113 = sbr.rel (%p111) target = $region16
      $region15: #{tpu_custom_call.1} parent=5 // pred_region
        // Predicated region
        $region17: #{tpu_custom_call.1} parent=15 // pred_check
          %p114 = pneg %p37
        $region18: #{tpu_custom_call.1} parent=15 // pred_check_branch
          %116 = sbr.rel (%p114) target = $region20
        $region19: #{tpu_custom_call.1} parent=15 // pred_region
          %s117 = sand.u32 %s27, 1
          %s118 = scalar_lea.sflag [#allocation3], %s117
          %s119 = sand.u32 %s27, 1
          %s120 = scalar_lea.vmem [#allocation2], %s119
          %s122 = ssub.s32 16, 16
          %123 = vsyncadd %s118, %s122
          %s124 = smul.addr %s17, 16
          %s125 = scalar_lea.hbm %s0, %s124
          %s127 = sshll.u32 %s120, 4
          %s128 = int_to_ptr.vmem [resolvable:$true] %s127
          %130 = dma.hbm_to_vmem [thread:$0]  %s125, 16, %s128, %s118
        $region20: #{tpu_custom_call.1} parent=15 // pred_fallthru
          _
        // Predicated region
        $region21: #{tpu_custom_call.1} parent=15 // pred_check
          %p131 = pneg %p63
        $region22: #{tpu_custom_call.1} parent=15 // pred_check_branch
          %133 = sbr.rel (%p131) target = $region24
        $region23: #{tpu_custom_call.1} parent=15 // pred_region
          %s134 = sand.u32 %s53, 1
          %s135 = scalar_lea.sflag [#allocation6], %s134
          %s136 = sand.u32 %s53, 1
          %s137 = smul.addr %s136, 128
          %s138 = scalar_lea.vmem [#allocation5], %s137
          %s140 = ssub.s32 2048, 2048
          %141 = vsyncadd %s135, %s140
          %s142 = smul.addr %s17, 16
          %s143 = smul.addr %s142, 128
          %s144 = scalar_lea.hbm %s1, %s143
          %s145 = sshll.u32 %s138, 4
          %s146 = int_to_ptr.vmem [resolvable:$true] %s145
          %151 = dma.hbm_to_vmem [thread:$0]  %s144, 2048, %s146, %s135, 128, 128, 8
        $region24: #{tpu_custom_call.1} parent=15 // pred_fallthru
          _
      $region16: #{tpu_custom_call.1} parent=5 // pred_fallthru
        _
      %p152 = scmp.le.s32.totalorder 1, %s17
      %p153 = scmp.lt.s32.totalorder %s17, 3
      %p154 = pnand %p152, %p153
      %p155 = pneg %p154
      // Predicated region
      $region25: #{tpu_custom_call.1} parent=5 // pred_check
        _
      $region26: #{tpu_custom_call.1} parent=5 // pred_check_branch
        %157 = sbr.rel (%p154) target = $region28
      $region27: #{tpu_custom_call.1} parent=5 // pred_region
        %s158 = ssub.s32 %s17, 1
        %s159 = sand.u32 %s30, 1
        %s160 = scalar_lea.sflag [#allocation3], %s159
        %s161 = sand.u32 %s30, 1
        %s162 = scalar_lea.vmem [#allocation2], %s161
        // Predicated region
        $region29: #{tpu_custom_call.1} parent=27 // pred_check
          %p163 = pneg %p43
        $region30: #{tpu_custom_call.1} parent=27 // pred_check_branch
          %165 = sbr.rel (%p163) target = $region32
        $region31: #{tpu_custom_call.1} parent=27 // pred_region
          %166 = dma.done %s160, 16
        $region32: #{tpu_custom_call.1} parent=27 // pred_fallthru
          _
        %s167 = sand.u32 %s56, 1
        %s168 = scalar_lea.sflag [#allocation6], %s167
        %s169 = sand.u32 %s56, 1
        %s170 = smul.addr %s169, 128
        %s171 = scalar_lea.vmem [#allocation5], %s170
        // Predicated region
        $region33: #{tpu_custom_call.1} parent=27 // pred_check
          %p172 = pneg %p69
        $region34: #{tpu_custom_call.1} parent=27 // pred_check_branch
          %174 = sbr.rel (%p172) target = $region36
        $region35: #{tpu_custom_call.1} parent=27 // pred_region
          %175 = dma.done %s168, 2048
        $region36: #{tpu_custom_call.1} parent=27 // pred_fallthru
          _
        %s176 = sand.u32 %s30, 1
        %s177 = scalar_lea.sflag [#allocation3], %s176
        %s178 = sand.u32 %s30, 1
        %s179 = scalar_lea.vmem [#allocation2], %s178
        %p180 = pneg %p43
        %p181 = pneg %p40
        %s182 = sand.u32 %s56, 1
        %s183 = scalar_lea.sflag [#allocation6], %s182
        %s184 = sand.u32 %s56, 1
        %s185 = smul.addr %s184, 128
        %s186 = scalar_lea.vmem [#allocation5], %s185
        %p187 = pneg %p69
        %p188 = pneg %p66
        %p189 = pneg %p95
        %p190 = pneg %p92
        %s191 = sand.u32 %s82, 1
        %s192 = scalar_lea.sflag [#allocation4], %s191
        %s193 = sand.u32 %s82, 1
        %s194 = smul.addr %s193, 8
        %s195 = scalar_lea.vmem [#allocation7], %s194
        %v196 = vld [vmem:[%s162] sm:$0x1]
        %v197 = vld [vmem:[%s171] sm:$0xff]
        %v198 = vld [vmem:[%s171 + $0x8] sm:$0xff]
        %v199 = vld [vmem:[%s171 + $0x10] sm:$0xff]
        %v200 = vld [vmem:[%s171 + $0x18] sm:$0xff]
        %v201 = vld [vmem:[%s171 + $0x20] sm:$0xff]
        %v202 = vld [vmem:[%s171 + $0x28] sm:$0xff]
        %v203 = vld [vmem:[%s171 + $0x30] sm:$0xff]
        %v204 = vld [vmem:[%s171 + $0x38] sm:$0xff]
        %v205 = vld [vmem:[%s171 + $0x40] sm:$0xff]
        %v206 = vld [vmem:[%s171 + $0x48] sm:$0xff]
        %v207 = vld [vmem:[%s171 + $0x50] sm:$0xff]
        %v208 = vld [vmem:[%s171 + $0x58] sm:$0xff]
        %v209 = vld [vmem:[%s171 + $0x60] sm:$0xff]
        %v210 = vld [vmem:[%s171 + $0x68] sm:$0xff]
        %v211 = vld [vmem:[%s171 + $0x70] sm:$0xff]
        %v212 = vld [vmem:[%s171 + $0x78] sm:$0xff]
        %v213 = vlaneseq
        %v214 = vand.u32 %v213, 127
        %vm215 = vcmp.gt.f32.partialorder %v196, 0.4
        %v216 = vsel %vm215, 1, 0
        %v217 = vcvt.s32.f32 %v216
        %vm218 = vcmp.eq.s32.totalorder %v214, 0
        %219 = vrot.lane.b32.xlu0 %v217, 1
        %v220 = vpop.permute.xlu0 %219
        %v221 = vsel %vm218, 0.0, %v220
        %v222 = vsub.f32 1.0, %v221
        %v223 = vmul.f32 %v217, %v222
        %vm224 = vcmask 1040384
        %v225 = vsel %vm224, %v223, 0.0
        %226 = vadd.xlane.f32.xlu0 %v225
        %v227 = vpop.xlane.xlu0 %226
        %vm228 = vcmp.ge.s32.totalorder %v214, 1
        %229 = vrot.lane.b32.xlu0 %v223, 1
        %v230 = vpop.permute.xlu0 %229
        %v231 = vsel %vm228, %v230, 0.0
        %v232 = vadd.f32 %v223, %v231
        %vm233 = vcmp.ge.s32.totalorder %v214, 2
        %234 = vrot.lane.b32.xlu0 %v232, 2
        %v235 = vpop.permute.xlu0 %234
        %v236 = vsel %vm233, %v235, 0.0
        %v237 = vadd.f32 %v232, %v236
        %vm238 = vcmp.ge.s32.totalorder %v214, 4
        %239 = vrot.lane.b32.xlu0 %v237, 4
        %v240 = vpop.permute.xlu0 %239
        %v241 = vsel %vm238, %v240, 0.0
        %v242 = vadd.f32 %v237, %v241
        %vm243 = vcmp.ge.s32.totalorder %v214, 8
        %244 = vrot.lane.b32.xlu0 %v242, 8
        %v245 = vpop.permute.xlu0 %244
        %v246 = vsel %vm243, %v245, 0.0
        %v247 = vadd.f32 %v242, %v246
        %vm248 = vcmp.ge.s32.totalorder %v214, 16
        %249 = vrot.lane.b32.xlu0 %v247, 16
        %v250 = vpop.permute.xlu0 %249
        %v251 = vsel %vm248, %v250, 0.0
        %v252 = vadd.f32 %v247, %v251
        %vm253 = vcmp.ge.s32.totalorder %v214, 32
        %254 = vrot.lane.b32.xlu0 %v252, 32
        %v255 = vpop.permute.xlu0 %254
        %v256 = vsel %vm253, %v255, 0.0
        %v257 = vadd.f32 %v252, %v256
        %vm258 = vcmp.ge.s32.totalorder %v214, 64
        %259 = vrot.lane.b32.xlu0 %v257, 64
        %v260 = vpop.permute.xlu0 %259
        %v261 = vsel %vm258, %v260, 0.0
        %v262 = vadd.f32 %v257, %v261
        %vm263 = vcmp.gt.f32.partialorder %v217, 0.5
        %v264 = vcvt.f32.s32.to.zero.pseudo %v262
        %v265 = vsub.s32 %v264, 1
        %v266 = vsel %vm263, %v265, 4294967295
        %267 = vrot.lane.b32.xlu0 %v266, 1
        %v268 = vpop.permute.xlu0 %267
        %v269 = vsel %vm218, 4294967295, %v268
        %v270 = vlaneseq
        %v271 = vshrl.u32 %v270, 7
        %v272 = vlaneseq
        %v273 = vshrl.u32 %v272, 7
        %v274 = vsub.s32 0, %v273
        %v275 = vrot.slane %v266, %v274
        %vm276 = vcmp.eq.s32.totalorder %v275, %v271
        %v277 = vsel %vm276, 1, 0
        %v278 = vcvt.s32.f32 %v277
        %279 = vadd.xlane.f32.xlu0 %v278
        %v280 = vpop.xlane.xlu0 %279
        %v281 = vmax.f32 %v280, 1.0
        %v282 = vrcp.pop %v281
        %v283 = vmul.f32 1.0, %v282
        %vm284 = vcmp.gt.f32.partialorder %v280, 0.0
        %v285 = vsel %vm284, 1, 0
        %v286 = vcvt.s32.f32 %v285
        %v287 = vmul.f32 %v196, %v196
        %v289 = vlaneseq
        %v290 = vshrl.u32 %v289, 7
        %v291 = vsub.s32 0, %v290
        %v292 = vrot.slane %v196, %v291
        %v294 = vsel %vm276, %v292, 0.0
        %295 = vadd.xlane.f32.xlu0 %v294
        %v296 = vpop.xlane.xlu0 %295
        %v298 = vlaneseq
        %v299 = vshrl.u32 %v298, 7
        %v300 = vsub.s32 0, %v299
        %v301 = vrot.slane %v287, %v300
        %v303 = vsel %vm276, %v301, 0.0
        %304 = vadd.xlane.f32.xlu0 %v303
        %v305 = vpop.xlane.xlu0 %304
        %v306 = vmul.f32 %v296, %v283
        %v307 = vmul.f32 %v305, %v283
        %v308 = vmul.f32 %v306, %v306
        %v309 = vsub.f32 %v307, %v308
        %v310 = vmul.f32 %v286, %v309
        %v311 = vrot.slane %v310, 4
        %v312 = vadd.f32 %v310, %v311
        %v313 = vrot.slane %v312, 2
        %v314 = vadd.f32 %v312, %v313
        %v315 = vrot.slane %v314, 1
        %v316 = vadd.f32 %v314, %v315
        %v317 = vmax.f32 %v227, 1.0
        %v318 = vrcp.pop %v317
        %v319 = vmul.f32 %v316, %v318
        %v320 = vadd.f32 %v319, 0.0
        %s321 = vtos %v320
        %vm322 = vcmp.gt.f32.partialorder %v196, 0.7
        %v323 = vsel %vm322, 1, 0
        %v324 = vcvt.s32.f32 %v323
        %v325 = vlaneseq
        %v326 = vshrl.u32 %v325, 7
        %v327 = vsub.s32 0, %v326
        %v328 = vrot.slane %v269, %v327
        %vm329 = vcmp.eq.s32.totalorder %v328, %v271
        %vm330 = vmor %vm276, %vm329
        %v332 = vlaneseq
        %v333 = vshrl.u32 %v332, 7
        %v334 = vsub.s32 0, %v333
        %v335 = vrot.slane %v324, %v334
        %v337 = vsel %vm330, %v335, 0.0
        %338 = vadd.xlane.f32.xlu0 %v337
        %v339 = vpop.xlane.xlu0 %338
        %v340 = vmax.f32 %v339, 1.0
        %v341 = vrcp.pop %v340
        %v342 = vmul.f32 1.0, %v341
        %v343 = vmul.f32 %v278, %v283
        %v344 = vmul.f32 %v337, %v342
        %v345 = vsub.f32 %v343, %v344
        %346 = vmatprep.subr.mxu0 0.0
        %347 = vmatpush1.msra.mxu0 %v197
        %348 = vmatprep.subr.mxu0 0.0
        %349 = vmatpush1.msra.mxu0 %v198
        %350 = vmatprep.subr.mxu0 0.0
        %351 = vmatpush1.msra.mxu0 %v199
        %352 = vmatprep.subr.mxu0 0.0
        %353 = vmatpush1.msra.mxu0 %v200
        %354 = vmatprep.subr.mxu0 0.0
        %355 = vmatpush1.msra.mxu0 %v201
        %356 = vmatprep.subr.mxu0 0.0
        %357 = vmatpush1.msra.mxu0 %v202
        %358 = vmatprep.subr.mxu0 0.0
        %359 = vmatpush1.msra.mxu0 %v203
        %360 = vmatprep.subr.mxu0 0.0
        %361 = vmatpush1.msra.mxu0 %v204
        %362 = vmatprep.subr.mxu0 0.0
        %363 = vmatpush1.msra.mxu0 %v205
        %364 = vmatprep.subr.mxu0 0.0
        %365 = vmatpush1.msra.mxu0 %v206
        %366 = vmatprep.subr.mxu0 0.0
        %367 = vmatpush1.msra.mxu0 %v207
        %368 = vmatprep.subr.mxu0 0.0
        %369 = vmatpush1.msra.mxu0 %v208
        %370 = vmatprep.subr.mxu0 0.0
        %371 = vmatpush1.msra.mxu0 %v209
        %372 = vmatprep.subr.mxu0 0.0
        %373 = vmatpush1.msra.mxu0 %v210
        %374 = vmatprep.subr.mxu0 0.0
        %375 = vmatpush1.msra.mxu0 %v211
        %376 = vmatprep.subr.mxu0 0.0
        %377 = vmatpush1.msra.mxu0 %v212
        %378 = vmatprep.subr.mxu0 0.0
        %379 = vmatpush1.msra.mxu0 0.0
        %380 = vmatprep.subr.mxu0 0.0
        %381 = vmatpush1.msra.mxu0 0.0
        %382 = vmatprep.subr.mxu0 0.0
        %383 = vmatpush1.msra.mxu0 0.0
        %384 = vmatprep.subr.mxu0 0.0
        %385 = vmatpush1.msra.mxu0 0.0
        %386 = vmatprep.subr.mxu0 0.0
        %387 = vmatpush1.msra.mxu0 0.0
        %388 = vmatprep.subr.mxu0 0.0
        %389 = vmatpush1.msra.mxu0 0.0
        %390 = vmatprep.subr.mxu0 0.0
        %391 = vmatpush1.msra.mxu0 0.0
        %392 = vmatprep.subr.mxu0 0.0
        %393 = vmatpush1.msra.mxu0 0.0
        %394 = vmatprep.subr.mxu0 0.0
        %395 = vmatpush1.msra.mxu0 0.0
        %396 = vmatprep.subr.mxu0 0.0
        %397 = vmatpush1.msra.mxu0 0.0
        %398 = vmatprep.subr.mxu0 0.0
        %399 = vmatpush1.msra.mxu0 0.0
        %400 = vmatprep.subr.mxu0 0.0
        %401 = vmatpush1.msra.mxu0 0.0
        %402 = vmatprep.subr.mxu0 0.0
        %403 = vmatpush1.msra.mxu0 0.0
        %404 = vmatprep.subr.mxu0 0.0
        %405 = vmatpush1.msra.mxu0 0.0
        %406 = vmatprep.subr.mxu0 0.0
        %407 = vmatpush1.msra.mxu0 0.0
        %408 = vmatprep.subr.mxu0 0.0
        %409 = vmatpush1.msra.mxu0 0.0
        %410 = vmatprep.mubr.f32.mxu0 0.0
        %411 = vmatmul.mubr.f32.gmra.mrb[0].mxu0 %v345
        %v412 = vpop.f32.mrb[0].mxu0
        %v413 = vadd.f32 0.0, %v412
        %v414 = vpop.f32.mrb[0].mxu0
        %415 = vdwg.mxu0
        %v416 = vmul.f32 %v413, %v413
        %417 = vadd.xlane.f32.xlu0 %v416
        %v418 = vpop.xlane.xlu0 %417
        %v419 = vmul.f32 %v418, 0.03125
        %vm420 = vcmp.gt.f32.partialorder %v339, 0.0
        %vm421 = vmand %vm420, %vm284
        %v422 = vsel %vm421, 1, 0
        %v423 = vcvt.s32.f32 %v422
        %v424 = vmul.f32 %v423, %v419
        %vm425 = vcmask 7168
        %v426 = vsel %vm425, %v424, 0.0
        %427 = vadd.xlane.f32.xlu0 %v426
        %v428 = vpop.xlane.xlu0 %427
        %v429 = vrot.slane %v428, 4
        %v430 = vadd.f32 %v428, %v429
        %v431 = vrot.slane %v430, 2
        %v432 = vadd.f32 %v430, %v431
        %v433 = vrot.slane %v432, 1
        %v434 = vadd.f32 %v432, %v433
        %s435 = vtos %v434
        %v436 = vsel %vm425, %v423, 0.0
        %437 = vadd.xlane.f32.xlu0 %v436
        %v438 = vpop.xlane.xlu0 %437
        %v439 = vrot.slane %v438, 4
        %v440 = vadd.f32 %v438, %v439
        %v441 = vrot.slane %v440, 2
        %v442 = vadd.f32 %v440, %v441
        %v443 = vrot.slane %v442, 1
        %v444 = vadd.f32 %v442, %v443
        %s445 = vtos %v444
        %v446 = vstv %s435
        %v447 = vsel %vm218, %v446, 0.0
        %vm448 = vcmp.eq.s32.totalorder %v214, 1
        %v449 = vstv %s445
        %v450 = vsel %vm448, %v449, %v447
        %vm451 = vcmp.eq.s32.totalorder %v214, 2
        %v452 = vstv %s321
        %v453 = vsel %vm451, %v452, %v450
        %454 = vst [vmem:[%s195] sm:$0xff] %v453
        %s455 = sand.u32 %s82, 1
        %s456 = scalar_lea.sflag [#allocation4], %s455
        %s457 = sand.u32 %s82, 1
        %s458 = smul.addr %s457, 8
        %s459 = scalar_lea.vmem [#allocation7], %s458
        // Predicated region
        $region37: #{tpu_custom_call.1} parent=27 // pred_check
          %p460 = pneg %p92
        $region38: #{tpu_custom_call.1} parent=27 // pred_check_branch
          %462 = sbr.rel (%p460) target = $region40
        $region39: #{tpu_custom_call.1} parent=27 // pred_region
          %s464 = ssub.s32 128, 128
          %465 = vsyncadd %s456, %s464
          %s466 = smul.addr %s22, 128
          %s467 = scalar_lea.hbm %s2, %s466
          %s469 = sshll.u32 %s459, 4
          %s470 = int_to_ptr.vmem [resolvable:$true] %s469
          %472 = dma.vmem_to_hbm [thread:$0]  %s470, 128, %s467, %s456
        $region40: #{tpu_custom_call.1} parent=27 // pred_fallthru
          _
      $region28: #{tpu_custom_call.1} parent=5 // pred_fallthru
        _
      %p473 = scmp.le.s32.totalorder 2, %s17
      // Predicated region
      $region41: #{tpu_custom_call.1} parent=5 // pred_check
        %p474 = pneg %p473
      $region42: #{tpu_custom_call.1} parent=5 // pred_check_branch
        %476 = sbr.rel (%p474) target = $region44
      $region43: #{tpu_custom_call.1} parent=5 // pred_region
        %s477 = ssub.s32 %s17, 2
        // Predicated region
        $region45: #{tpu_custom_call.1} parent=43 // pred_check
          %p478 = pneg %p98
        $region46: #{tpu_custom_call.1} parent=43 // pred_check_branch
          %480 = sbr.rel (%p478) target = $region48
        $region47: #{tpu_custom_call.1} parent=43 // pred_region
          %s481 = sand.u32 %s83, 1
          %s482 = scalar_lea.sflag [#allocation4], %s481
          %s483 = sand.u32 %s83, 1
          %s484 = smul.addr %s483, 8
          %s485 = scalar_lea.vmem [#allocation7], %s484
          %486 = dma.done %s482, 128
        $region48: #{tpu_custom_call.1} parent=43 // pred_fallthru
          _
      $region44: #{tpu_custom_call.1} parent=5 // pred_fallthru
        _
    $region6: #{tpu_custom_call.1} parent=1 // loop_footer
      %s21 = sadd.s32 1, %s17
    $region7: #{tpu_custom_call.1} parent=1 // loop_footer_branch
      %16 = sbr.rel target = $region3
    $region8: #{tpu_custom_call.1} parent=1 // loop_exit
      _
    %487 = vsyncpa [#allocation3], 1
    %s488 = scalar_lea.sflag [#allocation3], 1
    %489 = vsyncpa %s488, 1
    %490 = vsyncpa [#allocation6], 1
    %s491 = scalar_lea.sflag [#allocation6], 1
    %492 = vsyncpa %s491, 1
    %493 = vsyncpa [#allocation4], 1
    %s494 = scalar_lea.sflag [#allocation4], 1
    %495 = vsyncpa %s494, 1

</llo_original>
